<compile_context>
chip_gen: v6e
topology: v6e:2x2x1
jax: 0.10.0
libtpu: 0.0.40
codegen_flags: <defaults>
</compile_context>

<pallas_src>
import jax
import jax.numpy as jnp
from jax.experimental import pallas as pl
from jax.experimental.pallas import tpu as pltpu


def _adaptive_reasoner_copy_kernel(h_hbm_ref, o_hbm_ref, sem):
    """Base-class forward contract: identity. Single direct HBM->HBM DMA."""
    cp = pltpu.make_async_copy(h_hbm_ref, o_hbm_ref, sem)
    cp.start()
    cp.wait()


class AdaptiveReasonerPallas:
    """Pallas counterpart of the (abstract) AdaptiveReasoner base class."""

    def __init__(self, hidden_size: int):
        self.hidden_size = hidden_size  # no parameters in the reference __init__

    def __call__(
        self,
        hidden_states,
        attention_mask=None,
        context_info=None,
        zero_copy: bool = False,
    ):
        # attention_mask / context_info accepted for interface parity but,
        # as in the base class, unused.
        assert hidden_states.shape[-1] == self.hidden_size

        if zero_copy:
            # Fastest possible "identity enhancement": no kernel, no traffic.
            return hidden_states

        nbytes = hidden_states.size * jnp.dtype(hidden_states.dtype).itemsize

        return pl.pallas_call(
            _adaptive_reasoner_copy_kernel,
            out_shape=jax.ShapeDtypeStruct(hidden_states.shape, hidden_states.dtype),
            # Whole arrays stay in HBM; the kernel issues one DMA between them.
            in_specs=[pl.BlockSpec(memory_space=pl.ANY)],
            out_specs=pl.BlockSpec(memory_space=pl.ANY),
            scratch_shapes=[pltpu.SemaphoreType.DMA],
            # Bandwidth-bound custom call: read + write of the full array.
            cost_estimate=pl.CostEstimate(
                flops=0, transcendentals=0, bytes_accessed=2 * int(nbytes)
            ),
        )(hidden_states)


if __name__ == "__main__":
    key = jax.random.PRNGKey(0)
    B, S, H = 2, 8, 128  # small shapes; H lane-aligned (128)

    hidden_states = jax.random.normal(key, (B, S, H), dtype=jnp.float32)
    attention_mask = jnp.ones((B, S), dtype=jnp.float32)  # ignored by base class

    reasoner = AdaptiveReasonerPallas(hidden_size=H)
    out = reasoner(hidden_states, attention_mask=attention_mask)
    out = jax.block_until_ready(out)

    assert out.shape == hidden_states.shape
    assert out.dtype == hidden_states.dtype
    assert bool(jnp.allclose(out, hidden_states))

    # Also exercise the zero-copy fast path (identity pass-through).
    out_fast = jax.block_until_ready(reasoner(hidden_states, zero_copy=True))
    assert bool(jnp.allclose(out_fast, hidden_states))

    print("KERNEL_OK")
</pallas_src>

<mosaic_0001>
module attributes {stable_mosaic.version = 11 : i64} {
  func.func @_adaptive_reasoner_copy_kernel(%arg0: memref<2x8x128xf32, #tpu.memory_space<any>>, %arg1: memref<2x8x128xf32, #tpu.memory_space<any>>, %arg2: memref<!tpu.dma_semaphore, #tpu.memory_space<semaphore_mem>>) attributes {dimension_semantics = [], scalar_prefetch = 0 : i64, scratch_operands = 1 : i64, tpu.core_type = #tpu.core_type<tc>} {
    tpu.enqueue_dma source(%arg0 : memref<2x8x128xf32, #tpu.memory_space<any>>) target(%arg1 : memref<2x8x128xf32, #tpu.memory_space<any>>) target_semaphore(%arg2 : memref<!tpu.dma_semaphore, #tpu.memory_space<semaphore_mem>>)
    tpu.wait_dma2 semaphore(%arg2 : memref<!tpu.dma_semaphore, #tpu.memory_space<semaphore_mem>>) src(%arg0 : memref<2x8x128xf32, #tpu.memory_space<any>>) dst(%arg1 : memref<2x8x128xf32, #tpu.memory_space<any>>)
    return
  }
}

</mosaic_0001>

<llo_original>
// kernel: tpu_custom_call.1
$region0: #{tpu_custom_call.1}
  #allocation0 [shape = 'u32[]', space=smem, size = 0x4, offset = 0x4, fixed_abs, tag = 'smem constant byte address 0x4 - core index']
  #allocation1 [shape = 'u32[144,128]{1,0:T(1,128)}', space=vmem, size = 0x12000, scoped, tag = 'internal scratch']
  #allocation2 [shape = 's32[1]{0}', space=sflag, size = 0x4, scoped, tag = 'scratch operand']
  #allocation3 [shape = 's32[]', space=sflag, size = 0x4, offset = 0, fixed_abs, tag = 'sflag constant byte address 0x0 - dummy sync flag']
  #allocation4 [shape = 'u32[0]{0}', space=smem, size = 0, offset = 0, fixed_abs, tag = 'smem constant byte address 0x0 - null']
  %s0 = inlined_call_operand.hbm [shape: f32[2,8,128], index: 0, kind: input, shape index: {}]
  %s1 = inlined_call_operand.hbm [shape: f32[2,8,128], index: 1, kind: output, shape index: {}]
  %s2 = sld [smem:[#allocation0]]
  $region2: #{tpu_custom_call.1} parent=0
    _
  %s4 = ssub.s32 1, %s2
  %s5 = scalar_select 0, %s4, %s2
  %s7 = sshll.u32 1, 14
  %s8 = sxor.u32 4294967295, %s7
  %12 = dma.general %s0, 256, %s1, [#allocation2], 131072, [#allocation4], 0, 0
  %s13 = smul.u32 2, 8
  %s14 = smul.u32 %s13, 1
  %s15 = sshll.u32 %s14, 4
  %16 = dma.done [#allocation2], %s15
  %17 = vsyncmov [#allocation2]
  %s18 = vpop.sfrf %17
  %p19 = scmp.eq.s32.totalorder %s18, 0
  %p20 = pneg %p19
  %22 = shalt.err (%p20)

</llo_original>
